<compile_context>
chip_gen: v7x
topology: tpu7x:2x2x1
jax: 0.10.0
libtpu: 0.0.40
codegen_flags: <defaults>
</compile_context>

<pallas_src>
import functools
import math

import jax
import jax.numpy as jnp
from jax import lax
from jax.experimental import pallas as pl
from jax.experimental.pallas import tpu as pltpu


def _round_up(x, m):
    return ((x + m - 1) // m) * m


def _fused_head_kernel(x_ref, wf_ref, wvo_ref, w1_ref, w2_ref,
                       vecs_ref, b2_ref, o_ref, *, eps):
    cd = wf_ref.dtype  # MXU operand dtype (bf16 or f32); accumulation is f32.

    # Packed (8, H) f32 vector block; rows 5..7 are zero padding.
    bf = vecs_ref[0:1, :]
    bvo = vecs_ref[1:2, :]
    ln_g = vecs_ref[2:3, :]
    ln_b = vecs_ref[3:4, :]
    b1 = vecs_ref[4:5, :]

    # fusion_layer on the (pre-concatenated, zero-padded) features.
    j = jnp.dot(x_ref[...], wf_ref[...],
                preferred_element_type=jnp.float32) + bf

    # Length-1-sequence MultiheadAttention == out_proj(v_proj(joint));
    # Wvo = Wv @ Wo and bvo = bv @ Wo + bo are prefused in the wrapper.
    att = jnp.dot(j.astype(cd), wvo_ref[...],
                  preferred_element_type=jnp.float32) + bvo

    # Residual + LayerNorm (f32, biased variance, eps inside the sqrt).
    y = att + j
    mean = jnp.mean(y, axis=-1, keepdims=True)
    c = y - mean
    var = jnp.mean(c * c, axis=-1, keepdims=True)
    yn = c * lax.rsqrt(var + eps)
    yn = yn * ln_g + ln_b

    # fc1 -> ReLU -> fc2 (output is a lane-dense, zero-padded 128-wide slab).
    h = jnp.dot(yn.astype(cd), w1_ref[...],
                preferred_element_type=jnp.float32) + b1
    h = jnp.maximum(h, 0.0)
    out = jnp.dot(h.astype(cd), w2_ref[...],
                  preferred_element_type=jnp.float32) + b2_ref[...]
    o_ref[...] = out.astype(o_ref.dtype)


@functools.partial(jax.jit, static_argnames=("bm", "compute_dtype", "eps"))
def _fused_head(image_features, text_features, params, *,
                bm=512, compute_dtype=jnp.bfloat16, eps=1e-5):
    """Fused head; returns the (B, num_outputs) pre-slice logits."""
    B, d_img = image_features.shape
    _, d_txt = text_features.shape
    d_cat = d_img + d_txt
    H = params["wf"].shape[1]
    n_out = params["w2"].shape[1]

    cd = compute_dtype
    f32 = jnp.float32
    out_dtype = f32 if cd == f32 else cd   # bf16 writeback on the fast path.

    # Lane-dense padded widths and cdiv-padded / core-split batch tiling.
    n_pad = _round_up(n_out, 128)
    d_pad = _round_up(d_cat, 128)
    b8 = _round_up(B, 8)
    bm_eff = min(bm, b8)
    if b8 >= 256:
        # Ensure >= 2 grid steps so the parallel axis can shard across the two
        # v7x TensorCores (harmless single extra step on v5e/v6e).
        bm_eff = min(bm_eff, _round_up((b8 + 1) // 2, 8))
    b_pad = _round_up(B, bm_eff)
    grid = (b_pad // bm_eff,)

    # --- input / weight preparation (wrapper-side, runs once under jit) -----
    x = jnp.concatenate([image_features, text_features], axis=1).astype(cd)
    x = jnp.pad(x, ((0, b_pad - B), (0, d_pad - d_cat)))

    wf = jnp.pad(params["wf"].astype(cd), ((0, d_pad - d_cat), (0, 0)))

    # Prefuse the attention V / out projections (exact up to rounding because
    # the softmax over a single key is exactly 1).
    wvo = jnp.dot(params["wv"].astype(f32), params["wo"].astype(f32),
                  precision=lax.Precision.HIGHEST).astype(cd)
    bvo = (jnp.dot(params["bv"].astype(f32), params["wo"].astype(f32),
                   precision=lax.Precision.HIGHEST)
           + params["bo"].astype(f32))

    w1 = params["w1"].astype(cd)
    w2 = jnp.pad(params["w2"].astype(cd), ((0, 0), (0, n_pad - n_out)))
    b2 = jnp.pad(params["b2"].reshape(1, n_out).astype(f32),
                 ((0, 0), (0, n_pad - n_out)))

    # Pack the five (H,) vectors into one (8, H) f32 block.
    vecs = jnp.zeros((8, H), f32)
    vecs = vecs.at[0].set(params["bf"].astype(f32))
    vecs = vecs.at[1].set(bvo)
    vecs = vecs.at[2].set(params["ln_g"].astype(f32))
    vecs = vecs.at[3].set(params["ln_b"].astype(f32))
    vecs = vecs.at[4].set(params["b1"].astype(f32))

    # --- specs, cost estimate, VMEM budget -----------------------------------
    def full_block(shape):
        return pl.BlockSpec(shape, lambda i: (0, 0))

    itemsize = jnp.dtype(cd).itemsize
    out_itemsize = jnp.dtype(out_dtype).itemsize
    weight_elems = d_pad * H + 2 * H * H + H * n_pad
    flops = 2 * b_pad * (d_pad * H + 2 * H * H + H * n_pad) + 12 * b_pad * H
    bytes_accessed = (b_pad * d_pad * itemsize
                      + weight_elems * itemsize
                      + (8 * H + n_pad) * 4
                      + b_pad * n_pad * out_itemsize)
    vmem_est = int(2 * bm_eff * d_pad * itemsize        # double-buffered input
                   + 2 * bm_eff * n_pad * out_itemsize  # double-buffered output
                   + 2 * weight_elems * itemsize        # double-buffered weights
                   + 2 * (8 * H + n_pad) * 4
                   + 8 * bm_eff * H * 4                 # f32 intermediates
                   + (4 << 20))                         # headroom
    vmem_limit = max(16 << 20, min(vmem_est, 48 << 20))

    out = pl.pallas_call(
        functools.partial(_fused_head_kernel, eps=eps),
        out_shape=jax.ShapeDtypeStruct((b_pad, n_pad), out_dtype),
        grid_spec=pltpu.PrefetchScalarGridSpec(
            num_scalar_prefetch=0,
            grid=grid,
            in_specs=[
                pl.BlockSpec((bm_eff, d_pad), lambda i: (i, 0)),  # features
                full_block((d_pad, H)),       # fusion W (zero-padded rows)
                full_block((H, H)),           # fused attention Wv@Wo
                full_block((H, H)),           # fc1
                full_block((H, n_pad)),       # fc2 (lane-dense padded)
                full_block((8, H)),           # packed bias/LN vectors (f32)
                full_block((1, n_pad)),       # fc2 bias (padded, f32)
            ],
            out_specs=pl.BlockSpec((bm_eff, n_pad), lambda i: (i, 0)),
        ),
        compiler_params=pltpu.CompilerParams(
            dimension_semantics=("parallel",),
            vmem_limit_bytes=vmem_limit,
        ),
        cost_estimate=pl.CostEstimate(
            flops=flops, transcendentals=b_pad, bytes_accessed=bytes_accessed),
    )(x, wf, wvo, w1, w2, vecs, b2)

    return out[:B, :n_out]


def concat_linear_attn_mlp(image_features, text_features, params, *,
                           bm=512, compute_dtype=jnp.bfloat16):
    """Same output dict as ConcatLinearAttnMLP.forward (post-backbone)."""
    # TODO(synk): image_model / text_model are arbitrary external backbones and
    # are not translated; this head consumes their output feature vectors.
    x = _fused_head(image_features, text_features, params,
                    bm=bm, compute_dtype=compute_dtype).astype(jnp.float32)
    return {
        "left_fingertip": x[:, 0:3],
        "right_fingertip": x[:, 3:6],
        "force": x[:, 6:9],
        "grip_force": x[:, 9],
    }


def _reference_forward(image_features, text_features, p, *, num_heads=8,
                       eps=1e-5):
    """Pure-JAX reference with the *full* attention (Q/K/softmax included)."""
    def mm(a, b):
        return jnp.dot(a, b, precision=lax.Precision.HIGHEST)

    x = jnp.concatenate([image_features, text_features], axis=1)
    j = mm(x, p["wf"]) + p["bf"]
    B, H = j.shape
    dh = H // num_heads
    q = mm(j, p["wq"]) + p["bq"]
    k = mm(j, p["wk"]) + p["bk"]
    v = mm(j, p["wv"]) + p["bv"]
    qh = q.reshape(B, num_heads, dh)
    kh = k.reshape(B, num_heads, dh)
    vh = v.reshape(B, num_heads, dh)
    scores = jnp.sum(qh * kh, axis=-1, keepdims=True) / math.sqrt(dh)
    w = jax.nn.softmax(scores, axis=-1)          # length-1 key axis -> all 1.0
    attn = (w * vh).reshape(B, H)
    att = mm(attn, p["wo"]) + p["bo"]
    y = att + j
    mean = y.mean(-1, keepdims=True)
    var = ((y - mean) ** 2).mean(-1, keepdims=True)
    yn = (y - mean) / jnp.sqrt(var + eps) * p["ln_g"] + p["ln_b"]
    h = jnp.maximum(mm(yn, p["w1"]) + p["b1"], 0.0)
    return mm(h, p["w2"]) + p["b2"]


if __name__ == "__main__":
    # Small shapes consistent with the module (hidden divisible by 8 heads,
    # num_outputs=10 for the 3+3+3+1 output slices).
    batch = 16
    image_feature_dim = 32
    text_feature_dim = 48
    hidden_dim = 128
    num_outputs = 10

    key = jax.random.PRNGKey(0)
    ks = jax.random.split(key, 18)

    def init(k, shape, scale):
        return jax.random.normal(k, shape, dtype=jnp.float32) * scale

    d_cat = image_feature_dim + text_feature_dim
    img = jax.random.normal(ks[0], (batch, image_feature_dim), jnp.float32)
    txt = jax.random.normal(ks[1], (batch, text_feature_dim), jnp.float32)

    params = {
        "wf": init(ks[2], (d_cat, hidden_dim), 1.0 / math.sqrt(d_cat)),
        "bf": init(ks[3], (hidden_dim,), 0.02),
        "wq": init(ks[4], (hidden_dim, hidden_dim), 1.0 / math.sqrt(hidden_dim)),
        "bq": init(ks[5], (hidden_dim,), 0.02),
        "wk": init(ks[6], (hidden_dim, hidden_dim), 1.0 / math.sqrt(hidden_dim)),
        "bk": init(ks[7], (hidden_dim,), 0.02),
        "wv": init(ks[8], (hidden_dim, hidden_dim), 1.0 / math.sqrt(hidden_dim)),
        "bv": init(ks[9], (hidden_dim,), 0.02),
        "wo": init(ks[10], (hidden_dim, hidden_dim), 1.0 / math.sqrt(hidden_dim)),
        "bo": init(ks[11], (hidden_dim,), 0.02),
        "ln_g": 1.0 + init(ks[12], (hidden_dim,), 0.05),
        "ln_b": init(ks[13], (hidden_dim,), 0.05),
        "w1": init(ks[14], (hidden_dim, hidden_dim), 1.0 / math.sqrt(hidden_dim)),
        "b1": init(ks[15], (hidden_dim,), 0.02),
        "w2": init(ks[16], (hidden_dim, num_outputs), 1.0 / math.sqrt(hidden_dim)),
        "b2": init(ks[17], (num_outputs,), 0.02),
    }

    ref = _reference_forward(img, txt, params)

    # f32 compute path: tight check against the full-attention reference
    # (tolerance absorbs the Wv@Wo prefusion's extra rounding step).
    out_f32 = _fused_head(img, txt, params, compute_dtype=jnp.float32)
    out_f32 = jax.block_until_ready(out_f32)
    assert out_f32.shape == (batch, num_outputs)
    assert jnp.allclose(out_f32, ref, atol=5e-3, rtol=5e-3), float(
        jnp.max(jnp.abs(out_f32 - ref)))

    # bf16 compute path (default, per perf review): loose check + dict outputs.
    out_dict = concat_linear_attn_mlp(img, txt, params)
    out_dict = jax.block_until_ready(out_dict)
    assert out_dict["left_fingertip"].shape == (batch, 3)
    assert out_dict["right_fingertip"].shape == (batch, 3)
    assert out_dict["force"].shape == (batch, 3)
    assert out_dict["grip_force"].shape == (batch,)
    full_bf16 = jnp.concatenate(
        [out_dict["left_fingertip"], out_dict["right_fingertip"],
         out_dict["force"], out_dict["grip_force"][:, None]], axis=1)
    assert jnp.allclose(full_bf16, ref, atol=1e-1, rtol=1e-1), float(
        jnp.max(jnp.abs(full_bf16 - ref)))

    print("KERNEL_OK")
</pallas_src>

<mosaic_0001>
module attributes {stable_mosaic.version = 11 : i64} {
  func.func @_fused_head_kernel(%arg0: i32, %arg1: memref<16x128xf32, #tpu.memory_space<vmem>>, %arg2: memref<128x128xf32, #tpu.memory_space<vmem>>, %arg3: memref<128x128xf32, #tpu.memory_space<vmem>>, %arg4: memref<128x128xf32, #tpu.memory_space<vmem>>, %arg5: memref<128x128xf32, #tpu.memory_space<vmem>>, %arg6: memref<8x128xf32, #tpu.memory_space<vmem>>, %arg7: memref<1x128xf32, #tpu.memory_space<vmem>>, %arg8: memref<16x128xf32, #tpu.memory_space<vmem>>) attributes {dimension_semantics = [#tpu.dimension_semantics<parallel>], iteration_bounds = array<i64: 1>, scalar_prefetch = 0 : i64, scratch_operands = 0 : i64, tpu.core_type = #tpu.core_type<tc>, window_params = [{transform_indices = @transform_0, window_bounds = array<i64: 16, 128>}, {pipeline_mode = #tpu.pipeline_mode<synchronous>, transform_indices = @transform_1, window_bounds = array<i64: 128, 128>}, {pipeline_mode = #tpu.pipeline_mode<synchronous>, transform_indices = @transform_2, window_bounds = array<i64: 128, 128>}, {pipeline_mode = #tpu.pipeline_mode<synchronous>, transform_indices = @transform_3, window_bounds = array<i64: 128, 128>}, {pipeline_mode = #tpu.pipeline_mode<synchronous>, transform_indices = @transform_4, window_bounds = array<i64: 128, 128>}, {pipeline_mode = #tpu.pipeline_mode<synchronous>, transform_indices = @transform_5, window_bounds = array<i64: 8, 128>}, {pipeline_mode = #tpu.pipeline_mode<synchronous>, transform_indices = @transform_6, window_bounds = array<i64: 1, 128>}, {transform_indices = @transform_7, window_bounds = array<i64: 16, 128>}]} {
    %c0 = arith.constant 0 : index
    %c0_0 = arith.constant 0 : index
    %0 = vector.load %arg6[%c0, %c0_0] : memref<8x128xf32, #tpu.memory_space<vmem>>, vector<1x128xf32>
    %c1 = arith.constant 1 : index
    %c0_1 = arith.constant 0 : index
    %1 = vector.load %arg6[%c1, %c0_1] : memref<8x128xf32, #tpu.memory_space<vmem>>, vector<1x128xf32>
    %c2 = arith.constant 2 : index
    %c0_2 = arith.constant 0 : index
    %2 = vector.load %arg6[%c2, %c0_2] : memref<8x128xf32, #tpu.memory_space<vmem>>, vector<1x128xf32>
    %c3 = arith.constant 3 : index
    %c0_3 = arith.constant 0 : index
    %3 = vector.load %arg6[%c3, %c0_3] : memref<8x128xf32, #tpu.memory_space<vmem>>, vector<1x128xf32>
    %c4 = arith.constant 4 : index
    %c0_4 = arith.constant 0 : index
    %4 = vector.load %arg6[%c4, %c0_4] : memref<8x128xf32, #tpu.memory_space<vmem>>, vector<1x128xf32>
    %c0_5 = arith.constant 0 : index
    %c0_6 = arith.constant 0 : index
    %5 = vector.load %arg1[%c0_5, %c0_6] : memref<16x128xf32, #tpu.memory_space<vmem>>, vector<16x128xf32>
    %c0_7 = arith.constant 0 : index
    %c0_8 = arith.constant 0 : index
    %6 = vector.load %arg2[%c0_7, %c0_8] : memref<128x128xf32, #tpu.memory_space<vmem>>, vector<128x128xf32>
    %cst = arith.constant dense<0.000000e+00> : vector<16x128xf32>
    %7 = tpu.matmul %5, %6, %cst {dimension_numbers = #tpu.dot_dimension_numbers<[1], [0], [0], [1], [0, 0, 1, 1], [], []>} : vector<16x128xf32>, vector<128x128xf32>, vector<16x128xf32> -> vector<16x128xf32>
    %8 = vector.broadcast %0 : vector<1x128xf32> to vector<16x128xf32>
    %9 = arith.addf %7, %8 : vector<16x128xf32>
    %c0_9 = arith.constant 0 : index
    %c0_10 = arith.constant 0 : index
    %10 = vector.load %arg3[%c0_9, %c0_10] : memref<128x128xf32, #tpu.memory_space<vmem>>, vector<128x128xf32>
    %cst_11 = arith.constant dense<0.000000e+00> : vector<16x128xf32>
    %11 = tpu.matmul %9, %10, %cst_11 {dimension_numbers = #tpu.dot_dimension_numbers<[1], [0], [0], [1], [0, 0, 1, 1], [], []>} : vector<16x128xf32>, vector<128x128xf32>, vector<16x128xf32> -> vector<16x128xf32>
    %12 = vector.broadcast %1 : vector<1x128xf32> to vector<16x128xf32>
    %13 = arith.addf %11, %12 : vector<16x128xf32>
    %14 = arith.addf %13, %9 : vector<16x128xf32>
    %cst_12 = arith.constant dense<0.000000e+00> : vector<16xf32>
    %15 = vector.multi_reduction <add>, %14, %cst_12 [1] : vector<16x128xf32> to vector<16xf32>
    %16 = vector.shape_cast %15 : vector<16xf32> to vector<16x1xf32>
    %cst_13 = arith.constant 1.280000e+02 : f32
    %17 = vector.broadcast %cst_13 : f32 to vector<16x1xf32>
    %18 = arith.divf %16, %17 : vector<16x1xf32>
    %19 = vector.broadcast %18 : vector<16x1xf32> to vector<16x128xf32>
    %20 = arith.subf %14, %19 : vector<16x128xf32>
    %21 = arith.mulf %20, %20 : vector<16x128xf32>
    %cst_14 = arith.constant dense<0.000000e+00> : vector<16xf32>
    %22 = vector.multi_reduction <add>, %21, %cst_14 [1] : vector<16x128xf32> to vector<16xf32>
    %23 = vector.shape_cast %22 : vector<16xf32> to vector<16x1xf32>
    %cst_15 = arith.constant 1.280000e+02 : f32
    %24 = vector.broadcast %cst_15 : f32 to vector<16x1xf32>
    %25 = arith.divf %23, %24 : vector<16x1xf32>
    %cst_16 = arith.constant 9.99999974E-6 : f32
    %26 = vector.broadcast %cst_16 : f32 to vector<16x1xf32>
    %27 = arith.addf %25, %26 : vector<16x1xf32>
    %28 = math.rsqrt %27 : vector<16x1xf32>
    %29 = vector.broadcast %28 : vector<16x1xf32> to vector<16x128xf32>
    %30 = arith.mulf %20, %29 : vector<16x128xf32>
    %31 = vector.broadcast %2 : vector<1x128xf32> to vector<16x128xf32>
    %32 = arith.mulf %30, %31 : vector<16x128xf32>
    %33 = vector.broadcast %3 : vector<1x128xf32> to vector<16x128xf32>
    %34 = arith.addf %32, %33 : vector<16x128xf32>
    %c0_17 = arith.constant 0 : index
    %c0_18 = arith.constant 0 : index
    %35 = vector.load %arg4[%c0_17, %c0_18] : memref<128x128xf32, #tpu.memory_space<vmem>>, vector<128x128xf32>
    %cst_19 = arith.constant dense<0.000000e+00> : vector<16x128xf32>
    %36 = tpu.matmul %34, %35, %cst_19 {dimension_numbers = #tpu.dot_dimension_numbers<[1], [0], [0], [1], [0, 0, 1, 1], [], []>} : vector<16x128xf32>, vector<128x128xf32>, vector<16x128xf32> -> vector<16x128xf32>
    %37 = vector.broadcast %4 : vector<1x128xf32> to vector<16x128xf32>
    %38 = arith.addf %36, %37 : vector<16x128xf32>
    %cst_20 = arith.constant 0.000000e+00 : f32
    %39 = vector.broadcast %cst_20 : f32 to vector<16x128xf32>
    %40 = arith.maximumf %38, %39 : vector<16x128xf32>
    %c0_21 = arith.constant 0 : index
    %c0_22 = arith.constant 0 : index
    %41 = vector.load %arg5[%c0_21, %c0_22] : memref<128x128xf32, #tpu.memory_space<vmem>>, vector<128x128xf32>
    %cst_23 = arith.constant dense<0.000000e+00> : vector<16x128xf32>
    %42 = tpu.matmul %40, %41, %cst_23 {dimension_numbers = #tpu.dot_dimension_numbers<[1], [0], [0], [1], [0, 0, 1, 1], [], []>} : vector<16x128xf32>, vector<128x128xf32>, vector<16x128xf32> -> vector<16x128xf32>
    %c0_24 = arith.constant 0 : index
    %c0_25 = arith.constant 0 : index
    %43 = vector.load %arg7[%c0_24, %c0_25] : memref<1x128xf32, #tpu.memory_space<vmem>>, vector<1x128xf32>
    %44 = vector.broadcast %43 : vector<1x128xf32> to vector<16x128xf32>
    %45 = arith.addf %42, %44 : vector<16x128xf32>
    %c0_26 = arith.constant 0 : index
    %c0_27 = arith.constant 0 : index
    %46 = vector.load %arg8[%c0_26, %c0_27] : memref<16x128xf32, #tpu.memory_space<vmem>>, vector<16x128xf32>
    tpu.vector_store %arg8[%c0_26, %c0_27], %45 {strides = array<i32>} : memref<16x128xf32, #tpu.memory_space<vmem>>, vector<16x128xf32>,
    return
  }
  func.func @transform_0(%arg0: i32) -> (i32, i32) {
    %c0_i32 = arith.constant 0 : i32
    %c0_i32_0 = arith.constant 0 : i32
    return %arg0, %c0_i32 : i32, i32
  }
  func.func @transform_1(%arg0: i32) -> (i32, i32) {
    %c0_i32 = arith.constant 0 : i32
    %c0_i32_0 = arith.constant 0 : i32
    %c0_i32_1 = arith.constant 0 : i32
    return %c0_i32, %c0_i32_0 : i32, i32
  }
  func.func @transform_2(%arg0: i32) -> (i32, i32) {
    %c0_i32 = arith.constant 0 : i32
    %c0_i32_0 = arith.constant 0 : i32
    %c0_i32_1 = arith.constant 0 : i32
    return %c0_i32, %c0_i32_0 : i32, i32
  }
  func.func @transform_3(%arg0: i32) -> (i32, i32) {
    %c0_i32 = arith.constant 0 : i32
    %c0_i32_0 = arith.constant 0 : i32
    %c0_i32_1 = arith.constant 0 : i32
    return %c0_i32, %c0_i32_0 : i32, i32
  }
  func.func @transform_4(%arg0: i32) -> (i32, i32) {
    %c0_i32 = arith.constant 0 : i32
    %c0_i32_0 = arith.constant 0 : i32
    %c0_i32_1 = arith.constant 0 : i32
    return %c0_i32, %c0_i32_0 : i32, i32
  }
  func.func @transform_5(%arg0: i32) -> (i32, i32) {
    %c0_i32 = arith.constant 0 : i32
    %c0_i32_0 = arith.constant 0 : i32
    %c0_i32_1 = arith.constant 0 : i32
    return %c0_i32, %c0_i32_0 : i32, i32
  }
  func.func @transform_6(%arg0: i32) -> (i32, i32) {
    %c0_i32 = arith.constant 0 : i32
    %c0_i32_0 = arith.constant 0 : i32
    %c0_i32_1 = arith.constant 0 : i32
    return %c0_i32, %c0_i32_0 : i32, i32
  }
  func.func @transform_7(%arg0: i32) -> (i32, i32) {
    %c0_i32 = arith.constant 0 : i32
    %c0_i32_0 = arith.constant 0 : i32
    return %arg0, %c0_i32 : i32, i32
  }
}

</mosaic_0001>

<llo_original>
// kernel: _fused_head.1
$region0: #{_fused_head.1}
  #allocation0 [shape = 'u32[]', space=smem, size = 0x4, offset = 0x4, fixed_abs, tag = 'smem constant byte address 0x4 - core index']
  #allocation1 [shape = 'u32[144,128]{1,0:T(1,128)}', space=vmem, size = 0x12000, scoped, tag = 'internal scratch']
  %s0 = inlined_call_operand.vmem [shape: f32[16,128], index: 0, kind: input, shape index: {}]
  %s1 = inlined_call_operand.vmem [shape: f32[128,128], index: 1, kind: input, shape index: {}]
  %s2 = inlined_call_operand.vmem [shape: f32[128,128], index: 2, kind: input, shape index: {}]
  %s3 = inlined_call_operand.vmem [shape: f32[128,128], index: 3, kind: input, shape index: {}]
  %s4 = inlined_call_operand.vmem [shape: f32[128,128], index: 4, kind: input, shape index: {}]
  %s5 = inlined_call_operand.vmem [shape: f32[8,128], index: 5, kind: input, shape index: {}]
  %s6 = inlined_call_operand.vmem [shape: f32[1,128], index: 6, kind: input, shape index: {}]
  %s7 = inlined_call_operand.hbm [shape: f32[16,128], index: 7, kind: output, shape index: {}]
  %s8 = sld [smem:[#allocation0]]
  $region38: #{_fused_head.1} parent=0
    _
  %s10 = ssub.s32 1, %s8
  %s11 = scalar_select 0, %s10, %s8
  $region1: #{_fused_head.1} parent=0
    #allocation2 [shape = 'u8[8192]{0}', space=vmem, size = 0x2000, scoped, tag = 'output window, operand 0, single buffered']
    #allocation3 [shape = 's32[1]{0}', space=sflag, size = 0x4, scoped, tag = 'scoped memory for _fused_head.1']
    %12 = vsyncpa [#allocation3], 0
    // Predicated region
    $region2: #{_fused_head.1} parent=1 // pred_check
      _
    $region3: #{_fused_head.1} parent=1 // pred_check_branch
      %14 = sbr.rel (0) target = $region5
    $region4: #{_fused_head.1} parent=1 // pred_region
      _
    $region5: #{_fused_head.1} parent=1 // pred_fallthru
      _
    // Predicated region
    $region6: #{_fused_head.1} parent=1 // pred_check
      _
    $region7: #{_fused_head.1} parent=1 // pred_check_branch
      %16 = sbr.rel (0) target = $region9
    $region8: #{_fused_head.1} parent=1 // pred_region
      _
    $region9: #{_fused_head.1} parent=1 // pred_fallthru
      _
    // Predicated region
    $region10: #{_fused_head.1} parent=1 // pred_check
      _
    $region11: #{_fused_head.1} parent=1 // pred_check_branch
      %18 = sbr.rel (0) target = $region13
    $region12: #{_fused_head.1} parent=1 // pred_region
      _
    $region13: #{_fused_head.1} parent=1 // pred_fallthru
      _
    // Predicated region
    $region14: #{_fused_head.1} parent=1 // pred_check
      _
    $region15: #{_fused_head.1} parent=1 // pred_check_branch
      %20 = sbr.rel (0) target = $region17
    $region16: #{_fused_head.1} parent=1 // pred_region
      _
    $region17: #{_fused_head.1} parent=1 // pred_fallthru
      _
    // Predicated region
    $region18: #{_fused_head.1} parent=1 // pred_check
      _
    $region19: #{_fused_head.1} parent=1 // pred_check_branch
      %22 = sbr.rel (0) target = $region21
    $region20: #{_fused_head.1} parent=1 // pred_region
      _
    $region21: #{_fused_head.1} parent=1 // pred_fallthru
      _
    // Predicated region
    $region22: #{_fused_head.1} parent=1 // pred_check
      _
    $region23: #{_fused_head.1} parent=1 // pred_check_branch
      %24 = sbr.rel (0) target = $region25
    $region24: #{_fused_head.1} parent=1 // pred_region
      _
    $region25: #{_fused_head.1} parent=1 // pred_fallthru
      _
    // Predicated region
    $region26: #{_fused_head.1} parent=1 // pred_check
      _
    $region27: #{_fused_head.1} parent=1 // pred_check_branch
      %26 = sbr.rel (0) target = $region29
    $region28: #{_fused_head.1} parent=1 // pred_region
      _
    $region29: #{_fused_head.1} parent=1 // pred_fallthru
      _
    %v27 = vld [vmem:[%s5] sm:$0x1]
    %v28 = vld [vmem:[%s5 + $0x1] sm:$0x1]
    %v29 = vld [vmem:[%s5 + $0x2] sm:$0x1]
    %v30 = vld [vmem:[%s5 + $0x3] sm:$0x1]
    %v31 = vld [vmem:[%s5 + $0x4] sm:$0x1]
    %v32 = vld [vmem:[%s0] sm:$0xff]
    %v33 = vld [vmem:[%s0 + $0x8] sm:$0xff]
    %v34 = vld [vmem:[%s1] sm:$0xff]
    %v35 = vld [vmem:[%s1 + $0x8] sm:$0xff]
    %v36 = vld [vmem:[%s1 + $0x10] sm:$0xff]
    %v37 = vld [vmem:[%s1 + $0x18] sm:$0xff]
    %v38 = vld [vmem:[%s1 + $0x20] sm:$0xff]
    %v39 = vld [vmem:[%s1 + $0x28] sm:$0xff]
    %v40 = vld [vmem:[%s1 + $0x30] sm:$0xff]
    %v41 = vld [vmem:[%s1 + $0x38] sm:$0xff]
    %v42 = vld [vmem:[%s1 + $0x40] sm:$0xff]
    %v43 = vld [vmem:[%s1 + $0x48] sm:$0xff]
    %v44 = vld [vmem:[%s1 + $0x50] sm:$0xff]
    %v45 = vld [vmem:[%s1 + $0x58] sm:$0xff]
    %v46 = vld [vmem:[%s1 + $0x60] sm:$0xff]
    %v47 = vld [vmem:[%s1 + $0x68] sm:$0xff]
    %v48 = vld [vmem:[%s1 + $0x70] sm:$0xff]
    %v49 = vld [vmem:[%s1 + $0x78] sm:$0xff]
    %v50 = vlaneseq
    %v51 = vshrl.u32 %v50, 7
    %v52 = vsub.s32 0, %v51
    %v53 = vrot.slane %v27, %v52
    %54 = vmatprep.subr.mxu0 0.0
    %55 = vmatpush1.msra.mxu0 %v34
    %56 = vmatprep.subr.mxu0 0.0
    %57 = vmatpush1.msra.mxu0 %v35
    %58 = vmatprep.subr.mxu0 0.0
    %59 = vmatpush1.msra.mxu0 %v36
    %60 = vmatprep.subr.mxu0 0.0
    %61 = vmatpush1.msra.mxu0 %v37
    %62 = vmatprep.subr.mxu0 0.0
    %63 = vmatpush1.msra.mxu0 %v38
    %64 = vmatprep.subr.mxu0 0.0
    %65 = vmatpush1.msra.mxu0 %v39
    %66 = vmatprep.subr.mxu0 0.0
    %67 = vmatpush1.msra.mxu0 %v40
    %68 = vmatprep.subr.mxu0 0.0
    %69 = vmatpush1.msra.mxu0 %v41
    %70 = vmatprep.subr.mxu0 0.0
    %71 = vmatpush1.msra.mxu0 %v42
    %72 = vmatprep.subr.mxu0 0.0
    %73 = vmatpush1.msra.mxu0 %v43
    %74 = vmatprep.subr.mxu0 0.0
    %75 = vmatpush1.msra.mxu0 %v44
    %76 = vmatprep.subr.mxu0 0.0
    %77 = vmatpush1.msra.mxu0 %v45
    %78 = vmatprep.subr.mxu0 0.0
    %79 = vmatpush1.msra.mxu0 %v46
    %80 = vmatprep.subr.mxu0 0.0
    %81 = vmatpush1.msra.mxu0 %v47
    %82 = vmatprep.subr.mxu0 0.0
    %83 = vmatpush1.msra.mxu0 %v48
    %84 = vmatprep.subr.mxu0 0.0
    %85 = vmatpush1.msra.mxu0 %v49
    %86 = vmatprep.subr.mxu0 0.0
    %87 = vmatpush1.msra.mxu0 0.0
    %88 = vmatprep.subr.mxu0 0.0
    %89 = vmatpush1.msra.mxu0 0.0
    %90 = vmatprep.subr.mxu0 0.0
    %91 = vmatpush1.msra.mxu0 0.0
    %92 = vmatprep.subr.mxu0 0.0
    %93 = vmatpush1.msra.mxu0 0.0
    %94 = vmatprep.subr.mxu0 0.0
    %95 = vmatpush1.msra.mxu0 0.0
    %96 = vmatprep.subr.mxu0 0.0
    %97 = vmatpush1.msra.mxu0 0.0
    %98 = vmatprep.subr.mxu0 0.0
    %99 = vmatpush1.msra.mxu0 0.0
    %100 = vmatprep.subr.mxu0 0.0
    %101 = vmatpush1.msra.mxu0 0.0
    %102 = vmatprep.subr.mxu0 0.0
    %103 = vmatpush1.msra.mxu0 0.0
    %104 = vmatprep.subr.mxu0 0.0
    %105 = vmatpush1.msra.mxu0 0.0
    %106 = vmatprep.subr.mxu0 0.0
    %107 = vmatpush1.msra.mxu0 0.0
    %108 = vmatprep.subr.mxu0 0.0
    %109 = vmatpush1.msra.mxu0 0.0
    %110 = vmatprep.subr.mxu0 0.0
    %111 = vmatpush1.msra.mxu0 0.0
    %112 = vmatprep.subr.mxu0 0.0
    %113 = vmatpush1.msra.mxu0 0.0
    %114 = vmatprep.subr.mxu0 0.0
    %115 = vmatpush1.msra.mxu0 0.0
    %116 = vmatprep.subr.mxu0 0.0
    %117 = vmatpush1.msra.mxu0 0.0
    %118 = vmatprep.mubr.f32.mxu0 0.0
    %119 = vmatmul.mubr.f32.gmra.mrb[0].mxu0 %v32
    %v120 = vpop.f32.mrb[0].mxu0
    %v121 = vadd.f32 %v53, %v120
    %v122 = vpop.f32.mrb[0].mxu0
    %123 = vmatprep.mubr.f32.mxu0 0.0
    %124 = vmatmul.mubr.f32.gmra.mrb[0].mxu0 %v33
    %v125 = vpop.f32.mrb[0].mxu0
    %v126 = vadd.f32 %v53, %v125
    %v127 = vpop.f32.mrb[0].mxu0
    %128 = vdwg.mxu0
    %v129 = vld [vmem:[%s2] sm:$0xff]
    %v130 = vld [vmem:[%s2 + $0x8] sm:$0xff]
    %v131 = vld [vmem:[%s2 + $0x10] sm:$0xff]
    %v132 = vld [vmem:[%s2 + $0x18] sm:$0xff]
    %v133 = vld [vmem:[%s2 + $0x20] sm:$0xff]
    %v134 = vld [vmem:[%s2 + $0x28] sm:$0xff]
    %v135 = vld [vmem:[%s2 + $0x30] sm:$0xff]
    %v136 = vld [vmem:[%s2 + $0x38] sm:$0xff]
    %v137 = vld [vmem:[%s2 + $0x40] sm:$0xff]
    %v138 = vld [vmem:[%s2 + $0x48] sm:$0xff]
    %v139 = vld [vmem:[%s2 + $0x50] sm:$0xff]
    %v140 = vld [vmem:[%s2 + $0x58] sm:$0xff]
    %v141 = vld [vmem:[%s2 + $0x60] sm:$0xff]
    %v142 = vld [vmem:[%s2 + $0x68] sm:$0xff]
    %v143 = vld [vmem:[%s2 + $0x70] sm:$0xff]
    %v144 = vld [vmem:[%s2 + $0x78] sm:$0xff]
    %v145 = vlaneseq
    %v146 = vshrl.u32 %v145, 7
    %v147 = vsub.s32 0, %v146
    %v148 = vrot.slane %v28, %v147
    %149 = vmatprep.subr.mxu0 0.0
    %150 = vmatpush1.msra.mxu0 %v129
    %151 = vmatprep.subr.mxu0 0.0
    %152 = vmatpush1.msra.mxu0 %v130
    %153 = vmatprep.subr.mxu0 0.0
    %154 = vmatpush1.msra.mxu0 %v131
    %155 = vmatprep.subr.mxu0 0.0
    %156 = vmatpush1.msra.mxu0 %v132
    %157 = vmatprep.subr.mxu0 0.0
    %158 = vmatpush1.msra.mxu0 %v133
    %159 = vmatprep.subr.mxu0 0.0
    %160 = vmatpush1.msra.mxu0 %v134
    %161 = vmatprep.subr.mxu0 0.0
    %162 = vmatpush1.msra.mxu0 %v135
    %163 = vmatprep.subr.mxu0 0.0
    %164 = vmatpush1.msra.mxu0 %v136
    %165 = vmatprep.subr.mxu0 0.0
    %166 = vmatpush1.msra.mxu0 %v137
    %167 = vmatprep.subr.mxu0 0.0
    %168 = vmatpush1.msra.mxu0 %v138
    %169 = vmatprep.subr.mxu0 0.0
    %170 = vmatpush1.msra.mxu0 %v139
    %171 = vmatprep.subr.mxu0 0.0
    %172 = vmatpush1.msra.mxu0 %v140
    %173 = vmatprep.subr.mxu0 0.0
    %174 = vmatpush1.msra.mxu0 %v141
    %175 = vmatprep.subr.mxu0 0.0
    %176 = vmatpush1.msra.mxu0 %v142
    %177 = vmatprep.subr.mxu0 0.0
    %178 = vmatpush1.msra.mxu0 %v143
    %179 = vmatprep.subr.mxu0 0.0
    %180 = vmatpush1.msra.mxu0 %v144
    %181 = vmatprep.subr.mxu0 0.0
    %182 = vmatpush1.msra.mxu0 0.0
    %183 = vmatprep.subr.mxu0 0.0
    %184 = vmatpush1.msra.mxu0 0.0
    %185 = vmatprep.subr.mxu0 0.0
    %186 = vmatpush1.msra.mxu0 0.0
    %187 = vmatprep.subr.mxu0 0.0
    %188 = vmatpush1.msra.mxu0 0.0
    %189 = vmatprep.subr.mxu0 0.0
    %190 = vmatpush1.msra.mxu0 0.0
    %191 = vmatprep.subr.mxu0 0.0
    %192 = vmatpush1.msra.mxu0 0.0
    %193 = vmatprep.subr.mxu0 0.0
    %194 = vmatpush1.msra.mxu0 0.0
    %195 = vmatprep.subr.mxu0 0.0
    %196 = vmatpush1.msra.mxu0 0.0
    %197 = vmatprep.subr.mxu0 0.0
    %198 = vmatpush1.msra.mxu0 0.0
    %199 = vmatprep.subr.mxu0 0.0
    %200 = vmatpush1.msra.mxu0 0.0
    %201 = vmatprep.subr.mxu0 0.0
    %202 = vmatpush1.msra.mxu0 0.0
    %203 = vmatprep.subr.mxu0 0.0
    %204 = vmatpush1.msra.mxu0 0.0
    %205 = vmatprep.subr.mxu0 0.0
    %206 = vmatpush1.msra.mxu0 0.0
    %207 = vmatprep.subr.mxu0 0.0
    %208 = vmatpush1.msra.mxu0 0.0
    %209 = vmatprep.subr.mxu0 0.0
    %210 = vmatpush1.msra.mxu0 0.0
    %211 = vmatprep.subr.mxu0 0.0
    %212 = vmatpush1.msra.mxu0 0.0
    %213 = vmatprep.mubr.f32.mxu0 0.0
    %214 = vmatmul.mubr.f32.gmra.mrb[0].mxu0 %v121
    %v215 = vpop.f32.mrb[0].mxu0
    %v216 = vadd.f32 %v148, %v215
    %v217 = vpop.f32.mrb[0].mxu0
    %218 = vmatprep.mubr.f32.mxu0 0.0
    %219 = vmatmul.mubr.f32.gmra.mrb[0].mxu0 %v126
    %v220 = vpop.f32.mrb[0].mxu0
    %v221 = vadd.f32 %v148, %v220
    %v222 = vpop.f32.mrb[0].mxu0
    %223 = vdwg.mxu0
    %v224 = vadd.f32 %v216, %v121
    %v225 = vadd.f32 %v221, %v126
    %226 = vadd.xlane.f32.xlu0 %v224
    %v227 = vpop.xlane.xlu0 %226
    %228 = vadd.xlane.f32.xlu0 %v225
    %v229 = vpop.xlane.xlu0 %228
    %v230 = vrcp.pop 128.0
    %v231 = vmul.f32 %v227, %v230
    %v232 = vmul.f32 %v229, %v230
    %v233 = vsub.f32 %v224, %v231
    %v234 = vsub.f32 %v225, %v232
    %v235 = vmul.f32 %v233, %v233
    %v236 = vmul.f32 %v234, %v234
    %237 = vadd.xlane.f32.xlu0 %v235
    %v238 = vpop.xlane.xlu0 %237
    %239 = vadd.xlane.f32.xlu0 %v236
    %v240 = vpop.xlane.xlu0 %239
    %v241 = vmul.f32 %v238, %v230
    %v242 = vmul.f32 %v240, %v230
    %v243 = vadd.f32 %v241, 1e-05
    %v244 = vadd.f32 %v242, 1e-05
    %v245 = vrsqrt.pop %v243
    %v246 = vrsqrt.pop %v244
    %v247 = vmul.f32 %v233, %v245
    %v248 = vmul.f32 %v234, %v246
    %v249 = vlaneseq
    %v250 = vshrl.u32 %v249, 7
    %v251 = vsub.s32 0, %v250
    %v252 = vrot.slane %v29, %v251
    %v253 = vmul.f32 %v247, %v252
    %v254 = vmul.f32 %v248, %v252
    %v255 = vlaneseq
    %v256 = vshrl.u32 %v255, 7
    %v257 = vsub.s32 0, %v256
    %v258 = vrot.slane %v30, %v257
    %v259 = vadd.f32 %v253, %v258
    %v260 = vadd.f32 %v254, %v258
    %v261 = vld [vmem:[%s3] sm:$0xff]
    %v262 = vld [vmem:[%s3 + $0x8] sm:$0xff]
    %v263 = vld [vmem:[%s3 + $0x10] sm:$0xff]
    %v264 = vld [vmem:[%s3 + $0x18] sm:$0xff]
    %v265 = vld [vmem:[%s3 + $0x20] sm:$0xff]
    %v266 = vld [vmem:[%s3 + $0x28] sm:$0xff]
    %v267 = vld [vmem:[%s3 + $0x30] sm:$0xff]
    %v268 = vld [vmem:[%s3 + $0x38] sm:$0xff]
    %v269 = vld [vmem:[%s3 + $0x40] sm:$0xff]
    %v270 = vld [vmem:[%s3 + $0x48] sm:$0xff]
    %v271 = vld [vmem:[%s3 + $0x50] sm:$0xff]
    %v272 = vld [vmem:[%s3 + $0x58] sm:$0xff]
    %v273 = vld [vmem:[%s3 + $0x60] sm:$0xff]
    %v274 = vld [vmem:[%s3 + $0x68] sm:$0xff]
    %v275 = vld [vmem:[%s3 + $0x70] sm:$0xff]
    %v276 = vld [vmem:[%s3 + $0x78] sm:$0xff]
    %v277 = vlaneseq
    %v278 = vshrl.u32 %v277, 7
    %v279 = vsub.s32 0, %v278
    %v280 = vrot.slane %v31, %v279
    %281 = vmatprep.subr.mxu0 0.0
    %282 = vmatpush1.msra.mxu0 %v261
    %283 = vmatprep.subr.mxu0 0.0
    %284 = vmatpush1.msra.mxu0 %v262
    %285 = vmatprep.subr.mxu0 0.0
    %286 = vmatpush1.msra.mxu0 %v263
    %287 = vmatprep.subr.mxu0 0.0
    %288 = vmatpush1.msra.mxu0 %v264
    %289 = vmatprep.subr.mxu0 0.0
    %290 = vmatpush1.msra.mxu0 %v265
    %291 = vmatprep.subr.mxu0 0.0
    %292 = vmatpush1.msra.mxu0 %v266
    %293 = vmatprep.subr.mxu0 0.0
    %294 = vmatpush1.msra.mxu0 %v267
    %295 = vmatprep.subr.mxu0 0.0
    %296 = vmatpush1.msra.mxu0 %v268
    %297 = vmatprep.subr.mxu0 0.0
    %298 = vmatpush1.msra.mxu0 %v269
    %299 = vmatprep.subr.mxu0 0.0
    %300 = vmatpush1.msra.mxu0 %v270
    %301 = vmatprep.subr.mxu0 0.0
    %302 = vmatpush1.msra.mxu0 %v271
    %303 = vmatprep.subr.mxu0 0.0
    %304 = vmatpush1.msra.mxu0 %v272
    %305 = vmatprep.subr.mxu0 0.0
    %306 = vmatpush1.msra.mxu0 %v273
    %307 = vmatprep.subr.mxu0 0.0
    %308 = vmatpush1.msra.mxu0 %v274
    %309 = vmatprep.subr.mxu0 0.0
    %310 = vmatpush1.msra.mxu0 %v275
    %311 = vmatprep.subr.mxu0 0.0
    %312 = vmatpush1.msra.mxu0 %v276
    %313 = vmatprep.subr.mxu0 0.0
    %314 = vmatpush1.msra.mxu0 0.0
    %315 = vmatprep.subr.mxu0 0.0
    %316 = vmatpush1.msra.mxu0 0.0
    %317 = vmatprep.subr.mxu0 0.0
    %318 = vmatpush1.msra.mxu0 0.0
    %319 = vmatprep.subr.mxu0 0.0
    %320 = vmatpush1.msra.mxu0 0.0
    %321 = vmatprep.subr.mxu0 0.0
    %322 = vmatpush1.msra.mxu0 0.0
    %323 = vmatprep.subr.mxu0 0.0
    %324 = vmatpush1.msra.mxu0 0.0
    %325 = vmatprep.subr.mxu0 0.0
    %326 = vmatpush1.msra.mxu0 0.0
    %327 = vmatprep.subr.mxu0 0.0
    %328 = vmatpush1.msra.mxu0 0.0
    %329 = vmatprep.subr.mxu0 0.0
    %330 = vmatpush1.msra.mxu0 0.0
    %331 = vmatprep.subr.mxu0 0.0
    %332 = vmatpush1.msra.mxu0 0.0
    %333 = vmatprep.subr.mxu0 0.0
    %334 = vmatpush1.msra.mxu0 0.0
    %335 = vmatprep.subr.mxu0 0.0
    %336 = vmatpush1.msra.mxu0 0.0
    %337 = vmatprep.subr.mxu0 0.0
    %338 = vmatpush1.msra.mxu0 0.0
    %339 = vmatprep.subr.mxu0 0.0
    %340 = vmatpush1.msra.mxu0 0.0
    %341 = vmatprep.subr.mxu0 0.0
    %342 = vmatpush1.msra.mxu0 0.0
    %343 = vmatprep.subr.mxu0 0.0
    %344 = vmatpush1.msra.mxu0 0.0
    %345 = vmatprep.mubr.f32.mxu0 0.0
    %346 = vmatmul.mubr.f32.gmra.mrb[0].mxu0 %v259
    %v347 = vpop.f32.mrb[0].mxu0
    %v348 = vadd.f32 %v280, %v347
    %v349 = vpop.f32.mrb[0].mxu0
    %350 = vmatprep.mubr.f32.mxu0 0.0
    %351 = vmatmul.mubr.f32.gmra.mrb[0].mxu0 %v260
    %v352 = vpop.f32.mrb[0].mxu0
    %v353 = vadd.f32 %v280, %v352
    %v354 = vpop.f32.mrb[0].mxu0
    %355 = vdwg.mxu0
    %v356 = vmax.f32 %v348, 0.0
    %v357 = vmax.f32 %v353, 0.0
    %v358 = vld [vmem:[%s4] sm:$0xff]
    %v359 = vld [vmem:[%s4 + $0x8] sm:$0xff]
    %v360 = vld [vmem:[%s4 + $0x10] sm:$0xff]
    %v361 = vld [vmem:[%s4 + $0x18] sm:$0xff]
    %v362 = vld [vmem:[%s4 + $0x20] sm:$0xff]
    %v363 = vld [vmem:[%s4 + $0x28] sm:$0xff]
    %v364 = vld [vmem:[%s4 + $0x30] sm:$0xff]
    %v365 = vld [vmem:[%s4 + $0x38] sm:$0xff]
    %v366 = vld [vmem:[%s4 + $0x40] sm:$0xff]
    %v367 = vld [vmem:[%s4 + $0x48] sm:$0xff]
    %v368 = vld [vmem:[%s4 + $0x50] sm:$0xff]
    %v369 = vld [vmem:[%s4 + $0x58] sm:$0xff]
    %v370 = vld [vmem:[%s4 + $0x60] sm:$0xff]
    %v371 = vld [vmem:[%s4 + $0x68] sm:$0xff]
    %v372 = vld [vmem:[%s4 + $0x70] sm:$0xff]
    %v373 = vld [vmem:[%s4 + $0x78] sm:$0xff]
    %v374 = vld [vmem:[%s6] sm:$0x1]
    %v376 = vlaneseq
    %v377 = vshrl.u32 %v376, 7
    %v378 = vsub.s32 0, %v377
    %v379 = vrot.slane %v374, %v378
    %381 = vmatprep.subr.mxu0 0.0
    %382 = vmatpush1.msra.mxu0 %v358
    %383 = vmatprep.subr.mxu0 0.0
    %384 = vmatpush1.msra.mxu0 %v359
    %385 = vmatprep.subr.mxu0 0.0
    %386 = vmatpush1.msra.mxu0 %v360
    %387 = vmatprep.subr.mxu0 0.0
    %388 = vmatpush1.msra.mxu0 %v361
    %389 = vmatprep.subr.mxu0 0.0
    %390 = vmatpush1.msra.mxu0 %v362
    %391 = vmatprep.subr.mxu0 0.0
    %392 = vmatpush1.msra.mxu0 %v363
    %393 = vmatprep.subr.mxu0 0.0
    %394 = vmatpush1.msra.mxu0 %v364
    %395 = vmatprep.subr.mxu0 0.0
    %396 = vmatpush1.msra.mxu0 %v365
    %397 = vmatprep.subr.mxu0 0.0
    %398 = vmatpush1.msra.mxu0 %v366
    %399 = vmatprep.subr.mxu0 0.0
    %400 = vmatpush1.msra.mxu0 %v367
    %401 = vmatprep.subr.mxu0 0.0
    %402 = vmatpush1.msra.mxu0 %v368
    %403 = vmatprep.subr.mxu0 0.0
    %404 = vmatpush1.msra.mxu0 %v369
    %405 = vmatprep.subr.mxu0 0.0
    %406 = vmatpush1.msra.mxu0 %v370
    %407 = vmatprep.subr.mxu0 0.0
    %408 = vmatpush1.msra.mxu0 %v371
    %409 = vmatprep.subr.mxu0 0.0
    %410 = vmatpush1.msra.mxu0 %v372
    %411 = vmatprep.subr.mxu0 0.0
    %412 = vmatpush1.msra.mxu0 %v373
    %413 = vmatprep.subr.mxu0 0.0
    %414 = vmatpush1.msra.mxu0 0.0
    %415 = vmatprep.subr.mxu0 0.0
    %416 = vmatpush1.msra.mxu0 0.0
    %417 = vmatprep.subr.mxu0 0.0
    %418 = vmatpush1.msra.mxu0 0.0
    %419 = vmatprep.subr.mxu0 0.0
    %420 = vmatpush1.msra.mxu0 0.0
    %421 = vmatprep.subr.mxu0 0.0
    %422 = vmatpush1.msra.mxu0 0.0
    %423 = vmatprep.subr.mxu0 0.0
    %424 = vmatpush1.msra.mxu0 0.0
    %425 = vmatprep.subr.mxu0 0.0
    %426 = vmatpush1.msra.mxu0 0.0
    %427 = vmatprep.subr.mxu0 0.0
    %428 = vmatpush1.msra.mxu0 0.0
    %429 = vmatprep.subr.mxu0 0.0
    %430 = vmatpush1.msra.mxu0 0.0
    %431 = vmatprep.subr.mxu0 0.0
    %432 = vmatpush1.msra.mxu0 0.0
    %433 = vmatprep.subr.mxu0 0.0
    %434 = vmatpush1.msra.mxu0 0.0
    %435 = vmatprep.subr.mxu0 0.0
    %436 = vmatpush1.msra.mxu0 0.0
    %437 = vmatprep.subr.mxu0 0.0
    %438 = vmatpush1.msra.mxu0 0.0
    %439 = vmatprep.subr.mxu0 0.0
    %440 = vmatpush1.msra.mxu0 0.0
    %441 = vmatprep.subr.mxu0 0.0
    %442 = vmatpush1.msra.mxu0 0.0
    %443 = vmatprep.subr.mxu0 0.0
    %444 = vmatpush1.msra.mxu0 0.0
    %445 = vmatprep.mubr.f32.mxu0 0.0
    %446 = vmatmul.mubr.f32.gmra.mrb[0].mxu0 %v356
    %v447 = vpop.f32.mrb[0].mxu0
    %v448 = vadd.f32 %v379, %v447
    %v449 = vpop.f32.mrb[0].mxu0
    %450 = vmatprep.mubr.f32.mxu0 0.0
    %451 = vmatmul.mubr.f32.gmra.mrb[0].mxu0 %v357
    %v452 = vpop.f32.mrb[0].mxu0
    %v453 = vadd.f32 %v379, %v452
    %v454 = vpop.f32.mrb[0].mxu0
    %455 = vdwg.mxu0
    %456 = vst [vmem:[#allocation2] sm:$0xff] %v448
    %457 = vst [vmem:[#allocation2 + $0x8] sm:$0xff] %v453
    // Predicated region
    $region30: #{_fused_head.1} parent=1 // pred_check
      _
    $region31: #{_fused_head.1} parent=1 // pred_check_branch
      %459 = sbr.rel (0) target = $region33
    $region32: #{_fused_head.1} parent=1 // pred_region
      %s461 = ssub.s32 256, 256
      %462 = vsyncadd [#allocation3], %s461
      %s463 = sshll.u32 [#allocation2], 4
      %s464 = int_to_ptr.vmem [resolvable:$true] %s463
      %469 = dma.vmem_to_hbm [thread:$0]  %s464, 256, %s7, [#allocation3], 128, 128, 8
    $region33: #{_fused_head.1} parent=1 // pred_fallthru
      _
    // Predicated region
    $region34: #{_fused_head.1} parent=1 // pred_check
      _
    $region35: #{_fused_head.1} parent=1 // pred_check_branch
      %471 = sbr.rel (0) target = $region37
    $region36: #{_fused_head.1} parent=1 // pred_region
      %472 = dma.done [#allocation3], 256
    $region37: #{_fused_head.1} parent=1 // pred_fallthru
      _
    %473 = vsyncpa [#allocation3], 1

</llo_original>
